<compile_context>
chip_gen: v6e
topology: v6e:2x2x1
jax: 0.10.0
libtpu: 0.0.40
codegen_flags: <defaults>
</compile_context>

<pallas_src>
import math

import jax
import jax.numpy as jnp
from jax.experimental import pallas as pl
from jax.experimental.pallas import tpu as pltpu


def _view_token_kernel(pat_ref, o_ref):
    # pat_ref: (tb, 128) pattern, already tiled to the full block height and
    # already in the output dtype; its index_map is constant so it is DMA'd
    # into VMEM only once and stays resident across the grid.
    # o_ref: (tb, 128) output block.  Store-only body (pure vld/vst), which is
    # exactly what a DMA-write-bound kernel wants.
    o_ref[...] = pat_ref[...]


def _round_up(x, m):
    return ((x + m - 1) // m) * m


def _default_block_bytes():
    # ~4 MiB blocks keep the ~0.35 us/step pipeline overhead under ~10% of the
    # per-block HBM drain time on v5e/v6e.  v7x HBM is ~3.2 TB/s per TC, so the
    # fixed step cost is proportionally larger there -> use ~8 MiB blocks
    # (still comfortable inside its 64 MiB VMEM once vmem_limit_bytes is set).
    try:
        info = pltpu.get_tpu_info()
        vmem = getattr(info, "vmem_capacity_bytes", None)
        if vmem is not None and vmem <= (64 << 20):   # v7x-class TensorCore
            return 8 << 20
    except Exception:
        pass
    return 4 << 20


def view_token_network(x, view_token, *, block_bytes=None,
                       min_pallas_bytes=1 << 20):
    """Pallas implementation of ViewTokenNetwork.forward.

    Args:
      x: any array; only x.shape[0] (batch) and x.dtype are used.
      view_token: [1, dim] parameter.
      block_bytes: target output-block size; defaults per-chip (4 MiB on
        v5e/v6e, 8 MiB on v7x).
      min_pallas_bytes: outputs smaller than this skip Pallas (launch overhead
        dominates) and use a fused XLA broadcast instead.

    Returns:
      [batch, dim] array of dtype x.dtype == view_token broadcast over batch.
    """
    batch = x.shape[0]
    dim = view_token.shape[-1]
    out_dtype = x.dtype
    itemsize = jnp.dtype(out_dtype).itemsize
    out_bytes = batch * dim * itemsize

    # Cast once (keep narrow dtypes narrow — HBM writeback is ~all the traffic).
    token = view_token.reshape(1, dim).astype(out_dtype)

    # Lane-dense path requires batch*dim to be a whole number of
    # lcm(dim, 128)-element periods of the flattened broadcast.
    period = math.lcm(dim, 128) if dim > 0 else 0
    lane_dense_ok = dim > 0 and batch > 0 and (batch * dim) % period == 0

    if not lane_dense_ok or out_bytes < min_pallas_bytes:
        # Tiny / awkward shapes: pallas_call launch overhead dwarfs the work;
        # XLA's native (fused) broadcast is the right tool.
        return jnp.broadcast_to(token, (batch, dim))

    rows = (batch * dim) // 128        # output viewed as (rows, 128)
    p_rows = period // 128             # broadcast period in 128-lane rows

    if block_bytes is None:
        block_bytes = _default_block_bytes()

    # Block height: multiple of the packed sublane tile (8 rows f32, 16 bf16,
    # 32 int8/fp8) AND of the pattern period, sized to ~block_bytes.
    sub = max(8, 32 // itemsize)
    base = math.lcm(sub, p_rows)
    target = max(base, (block_bytes // (128 * itemsize)) // base * base)

    if rows <= target:
        # Single block: the pre-tiled pattern would equal the whole output, so
        # Pallas would only add traffic.  Let XLA broadcast it.
        return jnp.broadcast_to(token, (batch, dim))

    tb = target
    nblk = pl.cdiv(rows, tb)
    if nblk > 1 and nblk % 2 == 1:
        # Nudge to an even block count so v7x's two TensorCores get equal
        # shares of the writeback (negligible cost on single-TC v5e/v6e).
        tb_even = _round_up(pl.cdiv(rows, nblk + 1), base)
        if tb_even >= base and pl.cdiv(rows, tb_even) % 2 == 0:
            tb = tb_even
            nblk = pl.cdiv(rows, tb)

    # One broadcast period laid out (p_rows, 128), then tiled (once, in XLA)
    # to the full block height so the kernel body is a plain copy.
    one_period = jnp.tile(token, (1, period // dim)).reshape(p_rows, 128)
    pattern = jnp.tile(one_period, (tb // p_rows, 1))            # (tb, 128)

    block_vmem = tb * 128 * itemsize
    # Double-buffered output + (up to) double-buffered resident pattern + slack.
    vmem_limit = min(64 << 20, 4 * block_vmem + (4 << 20))

    out = pl.pallas_call(
        _view_token_kernel,
        out_shape=jax.ShapeDtypeStruct((rows, 128), out_dtype),
        grid=(nblk,),
        in_specs=[pl.BlockSpec((tb, 128), lambda i: (0, 0))],
        out_specs=pl.BlockSpec((tb, 128), lambda i: (i, 0)),
        compiler_params=pltpu.CompilerParams(
            dimension_semantics=("parallel",),
            vmem_limit_bytes=vmem_limit),
        cost_estimate=pl.CostEstimate(
            flops=0, transcendentals=0,
            bytes_accessed=(rows + tb) * 128 * itemsize),
    )(pattern)

    # Row-major (rows, 128) is byte-identical to (batch, dim).
    # TODO(synk): if a downstream consumer forces a materialized (batch, dim<128)
    # layout, this reshape may lower to an XLA relayout copy; prefer consuming
    # the lane-dense (rows, 128) view directly in that case.
    return out.reshape(batch, dim)


if __name__ == "__main__":
    key = jax.random.PRNGKey(0)
    k_tok, k_tok3, k_x = jax.random.split(key, 3)

    # --- Case 1: module-typical tiny NCHW input, dim=32 -> XLA broadcast path
    #     (batch*dim = 64 is not 128-aligned, and it is far below 1 MiB).
    dim = 32
    view_token = jax.random.normal(k_tok, (1, dim), dtype=jnp.float32)
    x_small = jax.random.normal(k_x, (2, 4, 16, 16), dtype=jnp.float32)
    out_small = jax.block_until_ready(view_token_network(x_small, view_token))
    ref_small = jnp.broadcast_to(view_token, (x_small.shape[0], dim))
    assert out_small.shape == (2, dim)
    assert out_small.dtype == x_small.dtype
    assert jnp.array_equal(out_small, ref_small)

    # --- Case 2: Pallas path, dim=32 (p_rows == 1), f32, even grid.
    #     rows = 4096, tb = 512 -> 8 blocks.
    batch2 = 16384
    x2 = jnp.zeros((batch2, 4), dtype=jnp.float32)
    out2 = jax.block_until_ready(
        view_token_network(x2, view_token,
                           block_bytes=256 << 10, min_pallas_bytes=0))
    ref2 = jnp.broadcast_to(view_token, (batch2, dim))
    assert out2.shape == (batch2, dim) and out2.dtype == jnp.float32
    assert jnp.array_equal(out2, ref2)

    # --- Case 3: Pallas path, dim=96 (p_rows == 3): odd->even grid nudge and a
    #     clipped partial last block (rows = 3075, tb = 408 -> 8 blocks).
    dim3 = 96
    view_token3 = jax.random.normal(k_tok3, (1, dim3), dtype=jnp.float32)
    batch3 = 4100
    x3 = jnp.zeros((batch3, 1), dtype=jnp.float32)
    out3 = jax.block_until_ready(
        view_token_network(x3, view_token3,
                           block_bytes=256 << 10, min_pallas_bytes=0))
    ref3 = jnp.broadcast_to(view_token3, (batch3, dim3))
    assert out3.shape == (batch3, dim3)
    assert jnp.array_equal(out3, ref3)

    # --- Case 4: Pallas path, bf16 output (dtype-aware 16-row sublane tile).
    batch4 = 8192
    x4 = jnp.zeros((batch4, 4), dtype=jnp.bfloat16)
    out4 = jax.block_until_ready(
        view_token_network(x4, view_token,
                           block_bytes=128 << 10, min_pallas_bytes=0))
    ref4 = jnp.broadcast_to(view_token.astype(jnp.bfloat16), (batch4, dim))
    assert out4.dtype == jnp.bfloat16
    assert jnp.array_equal(out4, ref4)

    print("KERNEL_OK")
</pallas_src>

<mosaic_0001>
module attributes {stable_mosaic.version = 11 : i64} {
  func.func @_view_token_kernel(%arg0: i32, %arg1: memref<512x128xf32, #tpu.memory_space<vmem>>, %arg2: memref<512x128xf32, #tpu.memory_space<vmem>>) attributes {dimension_semantics = [#tpu.dimension_semantics<parallel>], iteration_bounds = array<i64: 8>, scalar_prefetch = 0 : i64, scratch_operands = 0 : i64, tpu.core_type = #tpu.core_type<tc>, window_params = [{pipeline_mode = #tpu.pipeline_mode<synchronous>, transform_indices = @transform_0, window_bounds = array<i64: 512, 128>}, {transform_indices = @transform_1, window_bounds = array<i64: 512, 128>}]} {
    %c0 = arith.constant 0 : index
    %c0_0 = arith.constant 0 : index
    %0 = vector.load %arg1[%c0, %c0_0] : memref<512x128xf32, #tpu.memory_space<vmem>>, vector<512x128xf32>
    %c0_1 = arith.constant 0 : index
    %c0_2 = arith.constant 0 : index
    %1 = vector.load %arg2[%c0_1, %c0_2] : memref<512x128xf32, #tpu.memory_space<vmem>>, vector<512x128xf32>
    tpu.vector_store %arg2[%c0_1, %c0_2], %0 {strides = array<i32>} : memref<512x128xf32, #tpu.memory_space<vmem>>, vector<512x128xf32>,
    return
  }
  func.func @transform_0(%arg0: i32) -> (i32, i32) {
    %c0_i32 = arith.constant 0 : i32
    %c0_i32_0 = arith.constant 0 : i32
    %c0_i32_1 = arith.constant 0 : i32
    return %c0_i32, %c0_i32_0 : i32, i32
  }
  func.func @transform_1(%arg0: i32) -> (i32, i32) {
    %c0_i32 = arith.constant 0 : i32
    %c0_i32_0 = arith.constant 0 : i32
    return %arg0, %c0_i32 : i32, i32
  }
}

</mosaic_0001>

<llo_original>
// kernel: tpu_custom_call.1
$region0: #{tpu_custom_call.1}
  #allocation0 [shape = 'u32[]', space=smem, size = 0x4, offset = 0x4, fixed_abs, tag = 'smem constant byte address 0x4 - core index']
  #allocation1 [shape = 'u32[144,128]{1,0:T(1,128)}', space=vmem, size = 0x12000, scoped, tag = 'internal scratch']
  %s0 = inlined_call_operand.hbm [shape: f32[512,128], index: 0, kind: input, shape index: {}]
  %s1 = inlined_call_operand.hbm [shape: f32[4096,128], index: 1, kind: output, shape index: {}]
  %s2 = sld [smem:[#allocation0]]
  $region41: #{tpu_custom_call.1} parent=0
    _
  %s4 = ssub.s32 1, %s2
  %s5 = scalar_select 0, %s4, %s2
  $region1: #{tpu_custom_call.1} parent=0
    #allocation2 [shape = 'u8[262144]{0}', space=vmem, size = 0x40000, scoped, tag = 'input window, operand 0, single buffered']
    #allocation3 [shape = 's32[2]{0}', space=sflag, size = 0x8, scoped, tag = 'scoped memory for tpu_custom_call.1']
    #allocation4 [shape = 's32[2]{0}', space=sflag, size = 0x8, scoped, tag = 'scoped memory for tpu_custom_call.1']
    #allocation5 [shape = 'u8[524288]{0}', space=vmem, size = 0x80000, scoped, tag = 'output window, operand 0']
    %6 = vsyncpa [#allocation3], 0
    %7 = vsyncpa [#allocation4], 0
    %s8 = scalar_lea.sflag [#allocation4], 1
    %9 = vsyncpa %s8, 0
    loop: start=0, step=1, limit=10
    $region2: #{tpu_custom_call.1} parent=1 // loop_pre_header
      _
    $region3: #{tpu_custom_call.1} parent=1 // loop_header
      %s11 = sphi 0, %s15
      %p12 = scmp.ge.s32.totalorder %s11, 10
      %s19 = sphi 0, %s19
      %s21 = sphi 0, %s19
      %s22 = sphi 0, %s21
      %s36 = sphi 0, %s22
      %s42 = sphi 0, %s44
      %s45 = sphi 0, %s42
      %s46 = sphi 0, %s45
      %s62 = sphi 0, %s46
    $region4: #{tpu_custom_call.1} parent=1 // loop_header_branch
      %14 = sbr.rel (%p12) target = $region8
    $region5: #{tpu_custom_call.1} parent=1 // loop_body
      %s16 = ssub.s32 %s11, 1
      %s17 = ssub.s32 %s11, 2
      %s18 = sadd.s32 %s11, 1
      %s20 = sadd.s32 %s19, 1
      %p23 = scmp.eq.s32.totalorder %s11, 7
      %p24 = scmp.ne.s32.totalorder %s19, %s21
      %p25 = scmp.eq.s32.totalorder %s11, 0
      %p26 = por %p24, %p25
      %p27 = scmp.ne.s32.totalorder %s19, %s21
      %p28 = scmp.eq.s32.totalorder %s16, 7
      %p29 = por %p27, %p28
      %p30 = scmp.ne.s32.totalorder %s21, %s22
      %p31 = scmp.eq.s32.totalorder %s16, 0
      %p32 = por %p30, %p31
      %p33 = scmp.ne.s32.totalorder %s21, %s22
      %p34 = scmp.eq.s32.totalorder %s17, 7
      %p35 = por %p33, %p34
      %p37 = scmp.ne.s32.totalorder %s22, %s36
      %p38 = scmp.eq.s32.totalorder %s17, 0
      %p39 = por %p37, %p38
      %s40 = ssub.s32 %s11, %s18
      %p41 = scmp.eq.s32.totalorder %s40, 0
      %s43 = sadd.s32 %s42, 1
      %s44 = scalar_select %p41, %s42, %s43
      %p47 = pneg %p41
      %p48 = scmp.eq.s32.totalorder %s11, 7
      %p49 = por %p47, %p48
      %p50 = scmp.ne.s32.totalorder %s42, %s45
      %p51 = scmp.eq.s32.totalorder %s11, 0
      %p52 = por %p50, %p51
      %p53 = scmp.ne.s32.totalorder %s42, %s45
      %p54 = scmp.eq.s32.totalorder %s16, 7
      %p55 = por %p53, %p54
      %p56 = scmp.ne.s32.totalorder %s45, %s46
      %p57 = scmp.eq.s32.totalorder %s16, 0
      %p58 = por %p56, %p57
      %p59 = scmp.ne.s32.totalorder %s45, %s46
      %p60 = scmp.eq.s32.totalorder %s17, 7
      %p61 = por %p59, %p60
      %p63 = scmp.ne.s32.totalorder %s46, %s62
      %p64 = scmp.eq.s32.totalorder %s17, 0
      %p65 = por %p63, %p64
      %p66 = scmp.le.s32.totalorder 1, %s11
      %p67 = scmp.lt.s32.totalorder %s11, 9
      %p68 = pnand %p66, %p67
      %p69 = pneg %p68
      // Predicated region
      $region9: #{tpu_custom_call.1} parent=5 // pred_check
        _
      $region10: #{tpu_custom_call.1} parent=5 // pred_check_branch
        %71 = sbr.rel (%p68) target = $region12
      $region11: #{tpu_custom_call.1} parent=5 // pred_region
        %s72 = ssub.s32 %s11, 1
        // Predicated region
        $region13: #{tpu_custom_call.1} parent=11 // pred_check
          %p73 = pneg %p32
        $region14: #{tpu_custom_call.1} parent=11 // pred_check_branch
          %75 = sbr.rel (%p73) target = $region16
        $region15: #{tpu_custom_call.1} parent=11 // pred_region
          %s77 = ssub.s32 8192, 8192
          %78 = vsyncadd [#allocation3], %s77
          %s79 = sshll.u32 [#allocation2], 4
          %s80 = int_to_ptr.vmem [resolvable:$true] %s79
          %85 = dma.hbm_to_vmem [thread:$0]  %s0, 8192, %s80, [#allocation3], 128, 128, 8
        $region16: #{tpu_custom_call.1} parent=11 // pred_fallthru
          _
      $region12: #{tpu_custom_call.1} parent=5 // pred_fallthru
        _
      %p86 = scmp.lt.s32.totalorder %s11, 8
      // Predicated region
      $region17: #{tpu_custom_call.1} parent=5 // pred_check
        %p87 = pneg %p86
      $region18: #{tpu_custom_call.1} parent=5 // pred_check_branch
        %89 = sbr.rel (%p87) target = $region20
      $region19: #{tpu_custom_call.1} parent=5 // pred_region
        _
      $region20: #{tpu_custom_call.1} parent=5 // pred_fallthru
        _
      %p90 = scmp.le.s32.totalorder 1, %s11
      %p91 = scmp.lt.s32.totalorder %s11, 9
      %p92 = pnand %p90, %p91
      %p93 = pneg %p92
      // Predicated region
      $region21: #{tpu_custom_call.1} parent=5 // pred_check
        _
      $region22: #{tpu_custom_call.1} parent=5 // pred_check_branch
        %95 = sbr.rel (%p92) target = $region24
      $region23: #{tpu_custom_call.1} parent=5 // pred_region
        %s96 = ssub.s32 %s11, 1
        // Predicated region
        $region25: #{tpu_custom_call.1} parent=23 // pred_check
          %p97 = pneg %p32
        $region26: #{tpu_custom_call.1} parent=23 // pred_check_branch
          %99 = sbr.rel (%p97) target = $region28
        $region27: #{tpu_custom_call.1} parent=23 // pred_region
          %100 = dma.done [#allocation3], 8192
        $region28: #{tpu_custom_call.1} parent=23 // pred_fallthru
          _
        %p101 = pneg %p32
        %p102 = pneg %p29
        %p103 = pneg %p58
        %p104 = pneg %p55
        %s105 = sand.u32 %s45, 1
        %s106 = scalar_lea.sflag [#allocation4], %s105
        %s107 = sand.u32 %s45, 1
        %s108 = smul.addr %s107, 512
        %s109 = scalar_lea.vmem [#allocation5], %s108
        %s110 = smul.u32 64, %s16
        %v111 = vld [vmem:[#allocation2] sm:$0xff]
        %v112 = vld [vmem:[#allocation2 + $0x8] sm:$0xff]
        %v113 = vld [vmem:[#allocation2 + $0x10] sm:$0xff]
        %v114 = vld [vmem:[#allocation2 + $0x18] sm:$0xff]
        %v115 = vld [vmem:[#allocation2 + $0x20] sm:$0xff]
        %v116 = vld [vmem:[#allocation2 + $0x28] sm:$0xff]
        %v117 = vld [vmem:[#allocation2 + $0x30] sm:$0xff]
        %v118 = vld [vmem:[#allocation2 + $0x38] sm:$0xff]
        %v119 = vld [vmem:[#allocation2 + $0x40] sm:$0xff]
        %v120 = vld [vmem:[#allocation2 + $0x48] sm:$0xff]
        %v121 = vld [vmem:[#allocation2 + $0x50] sm:$0xff]
        %v122 = vld [vmem:[#allocation2 + $0x58] sm:$0xff]
        %v123 = vld [vmem:[#allocation2 + $0x60] sm:$0xff]
        %v124 = vld [vmem:[#allocation2 + $0x68] sm:$0xff]
        %v125 = vld [vmem:[#allocation2 + $0x70] sm:$0xff]
        %v126 = vld [vmem:[#allocation2 + $0x78] sm:$0xff]
        %v127 = vld [vmem:[#allocation2 + $0x80] sm:$0xff]
        %v128 = vld [vmem:[#allocation2 + $0x88] sm:$0xff]
        %v129 = vld [vmem:[#allocation2 + $0x90] sm:$0xff]
        %v130 = vld [vmem:[#allocation2 + $0x98] sm:$0xff]
        %v131 = vld [vmem:[#allocation2 + $0xa0] sm:$0xff]
        %v132 = vld [vmem:[#allocation2 + $0xa8] sm:$0xff]
        %v133 = vld [vmem:[#allocation2 + $0xb0] sm:$0xff]
        %v134 = vld [vmem:[#allocation2 + $0xb8] sm:$0xff]
        %v135 = vld [vmem:[#allocation2 + $0xc0] sm:$0xff]
        %v136 = vld [vmem:[#allocation2 + $0xc8] sm:$0xff]
        %v137 = vld [vmem:[#allocation2 + $0xd0] sm:$0xff]
        %v138 = vld [vmem:[#allocation2 + $0xd8] sm:$0xff]
        %v139 = vld [vmem:[#allocation2 + $0xe0] sm:$0xff]
        %v140 = vld [vmem:[#allocation2 + $0xe8] sm:$0xff]
        %v141 = vld [vmem:[#allocation2 + $0xf0] sm:$0xff]
        %v142 = vld [vmem:[#allocation2 + $0xf8] sm:$0xff]
        %v143 = vld [vmem:[#allocation2 + $0x100] sm:$0xff]
        %v144 = vld [vmem:[#allocation2 + $0x108] sm:$0xff]
        %v145 = vld [vmem:[#allocation2 + $0x110] sm:$0xff]
        %v146 = vld [vmem:[#allocation2 + $0x118] sm:$0xff]
        %v147 = vld [vmem:[#allocation2 + $0x120] sm:$0xff]
        %v148 = vld [vmem:[#allocation2 + $0x128] sm:$0xff]
        %v149 = vld [vmem:[#allocation2 + $0x130] sm:$0xff]
        %v150 = vld [vmem:[#allocation2 + $0x138] sm:$0xff]
        %v151 = vld [vmem:[#allocation2 + $0x140] sm:$0xff]
        %v152 = vld [vmem:[#allocation2 + $0x148] sm:$0xff]
        %v153 = vld [vmem:[#allocation2 + $0x150] sm:$0xff]
        %v154 = vld [vmem:[#allocation2 + $0x158] sm:$0xff]
        %v155 = vld [vmem:[#allocation2 + $0x160] sm:$0xff]
        %v156 = vld [vmem:[#allocation2 + $0x168] sm:$0xff]
        %v157 = vld [vmem:[#allocation2 + $0x170] sm:$0xff]
        %v158 = vld [vmem:[#allocation2 + $0x178] sm:$0xff]
        %v159 = vld [vmem:[#allocation2 + $0x180] sm:$0xff]
        %v160 = vld [vmem:[#allocation2 + $0x188] sm:$0xff]
        %v161 = vld [vmem:[#allocation2 + $0x190] sm:$0xff]
        %v162 = vld [vmem:[#allocation2 + $0x198] sm:$0xff]
        %v163 = vld [vmem:[#allocation2 + $0x1a0] sm:$0xff]
        %v164 = vld [vmem:[#allocation2 + $0x1a8] sm:$0xff]
        %v165 = vld [vmem:[#allocation2 + $0x1b0] sm:$0xff]
        %v166 = vld [vmem:[#allocation2 + $0x1b8] sm:$0xff]
        %v167 = vld [vmem:[#allocation2 + $0x1c0] sm:$0xff]
        %v168 = vld [vmem:[#allocation2 + $0x1c8] sm:$0xff]
        %v169 = vld [vmem:[#allocation2 + $0x1d0] sm:$0xff]
        %v170 = vld [vmem:[#allocation2 + $0x1d8] sm:$0xff]
        %v171 = vld [vmem:[#allocation2 + $0x1e0] sm:$0xff]
        %v172 = vld [vmem:[#allocation2 + $0x1e8] sm:$0xff]
        %v173 = vld [vmem:[#allocation2 + $0x1f0] sm:$0xff]
        %v174 = vld [vmem:[#allocation2 + $0x1f8] sm:$0xff]
        %175 = vst [vmem:[%s109] sm:$0xff] %v111
        %176 = vst [vmem:[%s109 + $0x8] sm:$0xff] %v112
        %177 = vst [vmem:[%s109 + $0x10] sm:$0xff] %v113
        %178 = vst [vmem:[%s109 + $0x18] sm:$0xff] %v114
        %179 = vst [vmem:[%s109 + $0x20] sm:$0xff] %v115
        %180 = vst [vmem:[%s109 + $0x28] sm:$0xff] %v116
        %181 = vst [vmem:[%s109 + $0x30] sm:$0xff] %v117
        %182 = vst [vmem:[%s109 + $0x38] sm:$0xff] %v118
        %183 = vst [vmem:[%s109 + $0x40] sm:$0xff] %v119
        %184 = vst [vmem:[%s109 + $0x48] sm:$0xff] %v120
        %185 = vst [vmem:[%s109 + $0x50] sm:$0xff] %v121
        %186 = vst [vmem:[%s109 + $0x58] sm:$0xff] %v122
        %187 = vst [vmem:[%s109 + $0x60] sm:$0xff] %v123
        %188 = vst [vmem:[%s109 + $0x68] sm:$0xff] %v124
        %189 = vst [vmem:[%s109 + $0x70] sm:$0xff] %v125
        %190 = vst [vmem:[%s109 + $0x78] sm:$0xff] %v126
        %191 = vst [vmem:[%s109 + $0x80] sm:$0xff] %v127
        %192 = vst [vmem:[%s109 + $0x88] sm:$0xff] %v128
        %193 = vst [vmem:[%s109 + $0x90] sm:$0xff] %v129
        %194 = vst [vmem:[%s109 + $0x98] sm:$0xff] %v130
        %195 = vst [vmem:[%s109 + $0xa0] sm:$0xff] %v131
        %196 = vst [vmem:[%s109 + $0xa8] sm:$0xff] %v132
        %197 = vst [vmem:[%s109 + $0xb0] sm:$0xff] %v133
        %198 = vst [vmem:[%s109 + $0xb8] sm:$0xff] %v134
        %199 = vst [vmem:[%s109 + $0xc0] sm:$0xff] %v135
        %200 = vst [vmem:[%s109 + $0xc8] sm:$0xff] %v136
        %201 = vst [vmem:[%s109 + $0xd0] sm:$0xff] %v137
        %202 = vst [vmem:[%s109 + $0xd8] sm:$0xff] %v138
        %203 = vst [vmem:[%s109 + $0xe0] sm:$0xff] %v139
        %204 = vst [vmem:[%s109 + $0xe8] sm:$0xff] %v140
        %205 = vst [vmem:[%s109 + $0xf0] sm:$0xff] %v141
        %206 = vst [vmem:[%s109 + $0xf8] sm:$0xff] %v142
        %207 = vst [vmem:[%s109 + $0x100] sm:$0xff] %v143
        %208 = vst [vmem:[%s109 + $0x108] sm:$0xff] %v144
        %209 = vst [vmem:[%s109 + $0x110] sm:$0xff] %v145
        %210 = vst [vmem:[%s109 + $0x118] sm:$0xff] %v146
        %211 = vst [vmem:[%s109 + $0x120] sm:$0xff] %v147
        %212 = vst [vmem:[%s109 + $0x128] sm:$0xff] %v148
        %213 = vst [vmem:[%s109 + $0x130] sm:$0xff] %v149
        %214 = vst [vmem:[%s109 + $0x138] sm:$0xff] %v150
        %215 = vst [vmem:[%s109 + $0x140] sm:$0xff] %v151
        %216 = vst [vmem:[%s109 + $0x148] sm:$0xff] %v152
        %217 = vst [vmem:[%s109 + $0x150] sm:$0xff] %v153
        %218 = vst [vmem:[%s109 + $0x158] sm:$0xff] %v154
        %219 = vst [vmem:[%s109 + $0x160] sm:$0xff] %v155
        %220 = vst [vmem:[%s109 + $0x168] sm:$0xff] %v156
        %221 = vst [vmem:[%s109 + $0x170] sm:$0xff] %v157
        %222 = vst [vmem:[%s109 + $0x178] sm:$0xff] %v158
        %223 = vst [vmem:[%s109 + $0x180] sm:$0xff] %v159
        %224 = vst [vmem:[%s109 + $0x188] sm:$0xff] %v160
        %225 = vst [vmem:[%s109 + $0x190] sm:$0xff] %v161
        %226 = vst [vmem:[%s109 + $0x198] sm:$0xff] %v162
        %227 = vst [vmem:[%s109 + $0x1a0] sm:$0xff] %v163
        %228 = vst [vmem:[%s109 + $0x1a8] sm:$0xff] %v164
        %229 = vst [vmem:[%s109 + $0x1b0] sm:$0xff] %v165
        %230 = vst [vmem:[%s109 + $0x1b8] sm:$0xff] %v166
        %231 = vst [vmem:[%s109 + $0x1c0] sm:$0xff] %v167
        %232 = vst [vmem:[%s109 + $0x1c8] sm:$0xff] %v168
        %233 = vst [vmem:[%s109 + $0x1d0] sm:$0xff] %v169
        %234 = vst [vmem:[%s109 + $0x1d8] sm:$0xff] %v170
        %235 = vst [vmem:[%s109 + $0x1e0] sm:$0xff] %v171
        %236 = vst [vmem:[%s109 + $0x1e8] sm:$0xff] %v172
        %237 = vst [vmem:[%s109 + $0x1f0] sm:$0xff] %v173
        %238 = vst [vmem:[%s109 + $0x1f8] sm:$0xff] %v174
        %s239 = sand.u32 %s45, 1
        %s240 = scalar_lea.sflag [#allocation4], %s239
        %s241 = sand.u32 %s45, 1
        %s242 = smul.addr %s241, 512
        %s243 = scalar_lea.vmem [#allocation5], %s242
        // Predicated region
        $region29: #{tpu_custom_call.1} parent=23 // pred_check
          %p244 = pneg %p55
        $region30: #{tpu_custom_call.1} parent=23 // pred_check_branch
          %246 = sbr.rel (%p244) target = $region32
        $region31: #{tpu_custom_call.1} parent=23 // pred_region
          %s247 = smul.u32 64, %s16
          %s249 = ssub.s32 8192, 8192
          %250 = vsyncadd %s240, %s249
          %s251 = smul.addr %s247, 128
          %s252 = scalar_lea.hbm %s1, %s251
          %s253 = sshll.u32 %s243, 4
          %s254 = int_to_ptr.vmem [resolvable:$true] %s253
          %259 = dma.vmem_to_hbm [thread:$0]  %s254, 8192, %s252, %s240, 128, 128, 8
        $region32: #{tpu_custom_call.1} parent=23 // pred_fallthru
          _
      $region24: #{tpu_custom_call.1} parent=5 // pred_fallthru
        _
      %p260 = scmp.le.s32.totalorder 2, %s11
      // Predicated region
      $region33: #{tpu_custom_call.1} parent=5 // pred_check
        %p261 = pneg %p260
      $region34: #{tpu_custom_call.1} parent=5 // pred_check_branch
        %263 = sbr.rel (%p261) target = $region36
      $region35: #{tpu_custom_call.1} parent=5 // pred_region
        %s264 = ssub.s32 %s11, 2
        // Predicated region
        $region37: #{tpu_custom_call.1} parent=35 // pred_check
          %p265 = pneg %p61
        $region38: #{tpu_custom_call.1} parent=35 // pred_check_branch
          %267 = sbr.rel (%p265) target = $region40
        $region39: #{tpu_custom_call.1} parent=35 // pred_region
          %s268 = sand.u32 %s46, 1
          %s269 = scalar_lea.sflag [#allocation4], %s268
          %s270 = sand.u32 %s46, 1
          %s271 = smul.addr %s270, 512
          %s272 = scalar_lea.vmem [#allocation5], %s271
          %273 = dma.done %s269, 8192
        $region40: #{tpu_custom_call.1} parent=35 // pred_fallthru
          _
      $region36: #{tpu_custom_call.1} parent=5 // pred_fallthru
        _
    $region6: #{tpu_custom_call.1} parent=1 // loop_footer
      %s15 = sadd.s32 1, %s11
    $region7: #{tpu_custom_call.1} parent=1 // loop_footer_branch
      %10 = sbr.rel target = $region3
    $region8: #{tpu_custom_call.1} parent=1 // loop_exit
      _
    %274 = vsyncpa [#allocation3], 1
    %s275 = scalar_lea.sflag [#allocation3], 1
    %276 = vsyncpa %s275, 1
    %277 = vsyncpa [#allocation4], 1
    %s278 = scalar_lea.sflag [#allocation4], 1
    %279 = vsyncpa %s278, 1

</llo_original>
